<compile_context>
chip_gen: v6e
topology: v6e:2x2x1
jax: 0.10.0
libtpu: 0.0.40
codegen_flags: <defaults>
</compile_context>

<pallas_src>
import functools

import jax
import jax.numpy as jnp
from jax.experimental import pallas as pl
from jax.experimental.pallas import tpu as pltpu


def _layernorm_kernel(x_ref, gamma_ref, beta_ref, o_ref, *, eps, inv_d, n_pad):
    x = x_ref[...].astype(jnp.float32)                       # (tile_rows, Dp)
    # Pass 1: mean over the true d_model (pad lanes are zero, so the raw sum
    # is already correct; inv_d = 1 / true_d).
    mean = jnp.sum(x, axis=-1, keepdims=True) * inv_d        # (tile_rows, 1)
    # Pass 2 (VMEM-only): centered sum of squares. Pad lanes each contribute
    # (0 - mean)^2 = mean^2, which we subtract back out.
    diff = x - mean
    ssq = jnp.sum(diff * diff, axis=-1, keepdims=True)
    if n_pad:
        ssq = ssq - float(n_pad) * (mean * mean)
    var = jnp.maximum(ssq * inv_d, 0.0)                      # guard roundoff
    inv = jax.lax.rsqrt(var + eps)                           # EUP slot (free-ish)
    out = gamma_ref[...] * (diff * inv) + beta_ref[...]      # gamma/beta already f32
    o_ref[...] = out.astype(o_ref.dtype)


def _physical_vmem_bytes():
    try:
        return int(pltpu.get_tpu_info().vmem_capacity_bytes)
    except Exception:
        return 64 * 1024 * 1024  # conservative (v7x per-TC); safe on v5e/v6e too


def _auto_tile_rows(rows, d_pad, itemsize, sublane, vmem_cap, target_block_bytes):
    in_bytes_per_row = d_pad * itemsize
    f32_bytes_per_row = d_pad * 4
    # Resident per-row cost: double-buffered input + output blocks plus ~3
    # f32-wide intermediates (cast x, diff, pre-cast output).
    per_row_bytes = 4 * in_bytes_per_row + 3 * f32_bytes_per_row
    vmem_budget = (vmem_cap * 3) // 4           # leave compiler/scratch headroom
    by_vmem = max(sublane, vmem_budget // per_row_bytes)
    by_target = max(sublane, target_block_bytes // in_bytes_per_row)
    tile_rows = min(by_vmem, by_target)
    # Keep >= ~8 grid steps when the problem is big enough (each step >= ~1 MiB)
    # so v7x can shard rows over both TensorCores and DMA/compute overlap.
    min_steps = 8
    if rows * in_bytes_per_row >= min_steps * (1 << 20):
        tile_rows = min(tile_rows, pl.cdiv(rows, min_steps))
    # Never larger than the (sublane-rounded) problem itself.
    tile_rows = min(tile_rows, pl.cdiv(rows, sublane) * sublane)
    tile_rows = max(sublane, (tile_rows // sublane) * sublane)
    return int(tile_rows)


def layer_norm(x, gamma, beta, eps=1e-12, tile_rows=None, target_block_bytes=None):
    """x: (..., d_model); gamma, beta: (d_model,). Matches the PyTorch module."""
    orig_shape = x.shape
    d_model = orig_shape[-1]
    x2 = x.reshape(-1, d_model)
    rows = x2.shape[0]

    vmem_cap = _physical_vmem_bytes()
    if target_block_bytes is None:
        # Bigger blocks on big-VMEM chips (v5e/v6e: 128 MiB), smaller on v7x.
        target_block_bytes = 16 * 1024 * 1024 if vmem_cap >= 96 * 1024 * 1024 \
            else 8 * 1024 * 1024

    # Lane-align d_model by zero-padding (avoids masked vst.msk partial stores).
    # TODO(synk): for nearly-aligned large d_model the extra pad/slice HBM pass
    # may cost more than the masked-store penalty; could skip padding there.
    n_pad = (-d_model) % 128
    d_pad = d_model + n_pad
    if n_pad:
        x2 = jnp.pad(x2, ((0, 0), (0, n_pad)))
    gamma2 = gamma.astype(jnp.float32).reshape(-1)
    beta2 = beta.astype(jnp.float32).reshape(-1)
    if n_pad:
        gamma2 = jnp.pad(gamma2, (0, n_pad))
        beta2 = jnp.pad(beta2, (0, n_pad))
    gamma2 = gamma2.reshape(1, d_pad)
    beta2 = beta2.reshape(1, d_pad)

    itemsize = jnp.dtype(x2.dtype).itemsize
    # Sublane packing granularity: 8 rows for f32, 16 for bf16, 32 for int8/fp8.
    sublane = max(8, 32 // itemsize)

    if tile_rows is None:
        tile_rows = _auto_tile_rows(rows, d_pad, itemsize, sublane,
                                    vmem_cap, target_block_bytes)
    tile_rows = max(sublane, (int(tile_rows) // sublane) * sublane)
    tile_rows = min(tile_rows, max(sublane, pl.cdiv(rows, sublane) * sublane))

    grid = (pl.cdiv(rows, tile_rows),)

    # VMEM budget from the real working set; never exceeds physical VMEM.
    block_bytes = tile_rows * d_pad * itemsize
    f32_block_bytes = tile_rows * d_pad * 4
    working_set = 4 * block_bytes + 3 * f32_block_bytes + (4 << 20)  # params+slack
    vmem_limit = max(32 * 1024 * 1024, working_set)
    vmem_limit = min(vmem_limit, (vmem_cap * 7) // 8)

    kernel = functools.partial(_layernorm_kernel, eps=float(eps),
                               inv_d=1.0 / float(d_model), n_pad=int(n_pad))

    out = pl.pallas_call(
        kernel,
        out_shape=jax.ShapeDtypeStruct((rows, d_pad), x.dtype),
        grid_spec=pltpu.PrefetchScalarGridSpec(
            num_scalar_prefetch=0,
            grid=grid,
            in_specs=[
                pl.BlockSpec((tile_rows, d_pad), lambda i: (i, 0)),
                pl.BlockSpec((1, d_pad), lambda i: (0, 0)),
                pl.BlockSpec((1, d_pad), lambda i: (0, 0)),
            ],
            out_specs=pl.BlockSpec((tile_rows, d_pad), lambda i: (i, 0)),
        ),
        compiler_params=pltpu.CompilerParams(
            dimension_semantics=("parallel",),   # row axis shards over v7x's 2 TCs
            vmem_limit_bytes=int(vmem_limit),
        ),
    )(x2, gamma2, beta2)

    if n_pad:
        out = out[:, :d_model]
    return out.reshape(orig_shape)


if __name__ == "__main__":
    key = jax.random.PRNGKey(0)
    k_x, k_g, k_b = jax.random.split(key, 3)

    batch, seq, d_model = 2, 8, 128
    x = jax.random.normal(k_x, (batch, seq, d_model), dtype=jnp.float32)
    # Module default is ones/zeros; use random values to exercise the affine path.
    gamma = 1.0 + 0.1 * jax.random.normal(k_g, (d_model,), dtype=jnp.float32)
    beta = 0.1 * jax.random.normal(k_b, (d_model,), dtype=jnp.float32)

    out = layer_norm(x, gamma, beta, eps=1e-12)
    out = jax.block_until_ready(out)

    # Reference (same semantics as the PyTorch module: mean / var(unbiased=False)).
    mean = jnp.mean(x, axis=-1, keepdims=True)
    var = jnp.mean((x - mean) ** 2, axis=-1, keepdims=True)
    ref = gamma * ((x - mean) / jnp.sqrt(var + 1e-12)) + beta
    assert jnp.allclose(out, ref, atol=1e-5, rtol=1e-5)

    print("KERNEL_OK")
</pallas_src>

<mosaic_0001>
module attributes {stable_mosaic.version = 11 : i64} {
  func.func @_layernorm_kernel(%arg0: i32, %arg1: memref<16x128xf32, #tpu.memory_space<vmem>>, %arg2: memref<1x128xf32, #tpu.memory_space<vmem>>, %arg3: memref<1x128xf32, #tpu.memory_space<vmem>>, %arg4: memref<16x128xf32, #tpu.memory_space<vmem>>) attributes {dimension_semantics = [#tpu.dimension_semantics<parallel>], iteration_bounds = array<i64: 1>, scalar_prefetch = 0 : i64, scratch_operands = 0 : i64, tpu.core_type = #tpu.core_type<tc>, window_params = [{transform_indices = @transform_0, window_bounds = array<i64: 16, 128>}, {pipeline_mode = #tpu.pipeline_mode<synchronous>, transform_indices = @transform_1, window_bounds = array<i64: 1, 128>}, {pipeline_mode = #tpu.pipeline_mode<synchronous>, transform_indices = @transform_2, window_bounds = array<i64: 1, 128>}, {transform_indices = @transform_3, window_bounds = array<i64: 16, 128>}]} {
    %c0 = arith.constant 0 : index
    %c0_0 = arith.constant 0 : index
    %0 = vector.load %arg1[%c0, %c0_0] : memref<16x128xf32, #tpu.memory_space<vmem>>, vector<16x128xf32>
    %cst = arith.constant dense<0.000000e+00> : vector<16xf32>
    %1 = vector.multi_reduction <add>, %0, %cst [1] : vector<16x128xf32> to vector<16xf32>
    %2 = vector.shape_cast %1 : vector<16xf32> to vector<16x1xf32>
    %cst_1 = arith.constant 7.812500e-03 : f32
    %3 = vector.broadcast %cst_1 : f32 to vector<16x1xf32>
    %4 = arith.mulf %2, %3 : vector<16x1xf32>
    %5 = vector.broadcast %4 : vector<16x1xf32> to vector<16x128xf32>
    %6 = arith.subf %0, %5 : vector<16x128xf32>
    %7 = arith.mulf %6, %6 : vector<16x128xf32>
    %cst_2 = arith.constant dense<0.000000e+00> : vector<16xf32>
    %8 = vector.multi_reduction <add>, %7, %cst_2 [1] : vector<16x128xf32> to vector<16xf32>
    %9 = vector.shape_cast %8 : vector<16xf32> to vector<16x1xf32>
    %cst_3 = arith.constant 7.812500e-03 : f32
    %10 = vector.broadcast %cst_3 : f32 to vector<16x1xf32>
    %11 = arith.mulf %9, %10 : vector<16x1xf32>
    %cst_4 = arith.constant 0.000000e+00 : f32
    %12 = vector.broadcast %cst_4 : f32 to vector<16x1xf32>
    %13 = arith.maximumf %11, %12 : vector<16x1xf32>
    %cst_5 = arith.constant 9.99999996E-13 : f32
    %14 = vector.broadcast %cst_5 : f32 to vector<16x1xf32>
    %15 = arith.addf %13, %14 : vector<16x1xf32>
    %16 = math.rsqrt %15 : vector<16x1xf32>
    %c0_6 = arith.constant 0 : index
    %c0_7 = arith.constant 0 : index
    %17 = vector.load %arg2[%c0_6, %c0_7] : memref<1x128xf32, #tpu.memory_space<vmem>>, vector<1x128xf32>
    %18 = vector.broadcast %16 : vector<16x1xf32> to vector<16x128xf32>
    %19 = arith.mulf %6, %18 : vector<16x128xf32>
    %20 = vector.broadcast %17 : vector<1x128xf32> to vector<16x128xf32>
    %21 = arith.mulf %20, %19 : vector<16x128xf32>
    %c0_8 = arith.constant 0 : index
    %c0_9 = arith.constant 0 : index
    %22 = vector.load %arg3[%c0_8, %c0_9] : memref<1x128xf32, #tpu.memory_space<vmem>>, vector<1x128xf32>
    %23 = vector.broadcast %22 : vector<1x128xf32> to vector<16x128xf32>
    %24 = arith.addf %21, %23 : vector<16x128xf32>
    %c0_10 = arith.constant 0 : index
    %c0_11 = arith.constant 0 : index
    %25 = vector.load %arg4[%c0_10, %c0_11] : memref<16x128xf32, #tpu.memory_space<vmem>>, vector<16x128xf32>
    tpu.vector_store %arg4[%c0_10, %c0_11], %24 {strides = array<i32>} : memref<16x128xf32, #tpu.memory_space<vmem>>, vector<16x128xf32>,
    return
  }
  func.func @transform_0(%arg0: i32) -> (i32, i32) {
    %c0_i32 = arith.constant 0 : i32
    %c0_i32_0 = arith.constant 0 : i32
    return %arg0, %c0_i32 : i32, i32
  }
  func.func @transform_1(%arg0: i32) -> (i32, i32) {
    %c0_i32 = arith.constant 0 : i32
    %c0_i32_0 = arith.constant 0 : i32
    %c0_i32_1 = arith.constant 0 : i32
    return %c0_i32, %c0_i32_0 : i32, i32
  }
  func.func @transform_2(%arg0: i32) -> (i32, i32) {
    %c0_i32 = arith.constant 0 : i32
    %c0_i32_0 = arith.constant 0 : i32
    %c0_i32_1 = arith.constant 0 : i32
    return %c0_i32, %c0_i32_0 : i32, i32
  }
  func.func @transform_3(%arg0: i32) -> (i32, i32) {
    %c0_i32 = arith.constant 0 : i32
    %c0_i32_0 = arith.constant 0 : i32
    return %arg0, %c0_i32 : i32, i32
  }
}

</mosaic_0001>

<llo_original>
// kernel: tpu_custom_call.1
$region0: #{tpu_custom_call.1}
  #allocation0 [shape = 'u32[]', space=smem, size = 0x4, offset = 0x4, fixed_abs, tag = 'smem constant byte address 0x4 - core index']
  #allocation1 [shape = 'u32[144,128]{1,0:T(1,128)}', space=vmem, size = 0x12000, scoped, tag = 'internal scratch']
  %s0 = inlined_call_operand.hbm [shape: f32[16,128], index: 0, kind: input, shape index: {}]
  %s1 = inlined_call_operand.vmem [shape: f32[1,128], index: 1, kind: input, shape index: {}]
  %s2 = inlined_call_operand.vmem [shape: f32[1,128], index: 2, kind: input, shape index: {}]
  %s3 = inlined_call_operand.hbm [shape: f32[16,128], index: 3, kind: output, shape index: {}]
  %s4 = sld [smem:[#allocation0]]
  $region26: #{tpu_custom_call.1} parent=0
    _
  %s6 = ssub.s32 1, %s4
  %s7 = scalar_select 0, %s6, %s4
  $region1: #{tpu_custom_call.1} parent=0
    #allocation2 [shape = 'u8[8192]{0}', space=vmem, size = 0x2000, scoped, tag = 'input window, operand 0, single buffered']
    #allocation3 [shape = 's32[1]{0}', space=sflag, size = 0x4, scoped, tag = 'scoped memory for tpu_custom_call.1']
    #allocation4 [shape = 's32[1]{0}', space=sflag, size = 0x4, scoped, tag = 'scoped memory for tpu_custom_call.1']
    #allocation5 [shape = 'u8[8192]{0}', space=vmem, size = 0x2000, scoped, tag = 'output window, operand 0, single buffered']
    %8 = vsyncpa [#allocation3], 0
    %9 = vsyncpa [#allocation4], 0
    // Predicated region
    $region2: #{tpu_custom_call.1} parent=1 // pred_check
      _
    $region3: #{tpu_custom_call.1} parent=1 // pred_check_branch
      %11 = sbr.rel (0) target = $region5
    $region4: #{tpu_custom_call.1} parent=1 // pred_region
      %s13 = ssub.s32 256, 256
      %14 = vsyncadd [#allocation3], %s13
      %s15 = sshll.u32 [#allocation2], 4
      %s16 = int_to_ptr.vmem [resolvable:$true] %s15
      %21 = dma.hbm_to_vmem [thread:$0]  %s0, 256, %s16, [#allocation3], 128, 128, 8
    $region5: #{tpu_custom_call.1} parent=1 // pred_fallthru
      _
    // Predicated region
    $region6: #{tpu_custom_call.1} parent=1 // pred_check
      _
    $region7: #{tpu_custom_call.1} parent=1 // pred_check_branch
      %23 = sbr.rel (0) target = $region9
    $region8: #{tpu_custom_call.1} parent=1 // pred_region
      _
    $region9: #{tpu_custom_call.1} parent=1 // pred_fallthru
      _
    // Predicated region
    $region10: #{tpu_custom_call.1} parent=1 // pred_check
      _
    $region11: #{tpu_custom_call.1} parent=1 // pred_check_branch
      %25 = sbr.rel (0) target = $region13
    $region12: #{tpu_custom_call.1} parent=1 // pred_region
      _
    $region13: #{tpu_custom_call.1} parent=1 // pred_fallthru
      _
    // Predicated region
    $region14: #{tpu_custom_call.1} parent=1 // pred_check
      _
    $region15: #{tpu_custom_call.1} parent=1 // pred_check_branch
      %27 = sbr.rel (0) target = $region17
    $region16: #{tpu_custom_call.1} parent=1 // pred_region
      %28 = dma.done [#allocation3], 256
    $region17: #{tpu_custom_call.1} parent=1 // pred_fallthru
      _
    %v29 = vld [vmem:[#allocation2] sm:$0xff]
    %v30 = vld [vmem:[#allocation2 + $0x8] sm:$0xff]
    %31 = vadd.xlane.f32.xlu0 %v29
    %v32 = vpop.xlane.xlu0 %31
    %33 = vadd.xlane.f32.xlu0 %v30
    %v34 = vpop.xlane.xlu0 %33
    %v35 = vmul.f32 %v32, 0.0078125
    %v36 = vmul.f32 %v34, 0.0078125
    %v37 = vsub.f32 %v29, %v35
    %v38 = vsub.f32 %v30, %v36
    %v39 = vmul.f32 %v37, %v37
    %v40 = vmul.f32 %v38, %v38
    %41 = vadd.xlane.f32.xlu0 %v39
    %v42 = vpop.xlane.xlu0 %41
    %43 = vadd.xlane.f32.xlu0 %v40
    %v44 = vpop.xlane.xlu0 %43
    %v45 = vmul.f32 %v42, 0.0078125
    %v46 = vmul.f32 %v44, 0.0078125
    %v47 = vmax.f32 %v45, 0.0
    %v48 = vmax.f32 %v46, 0.0
    %v49 = vadd.f32 %v47, 1e-12
    %v50 = vadd.f32 %v48, 1e-12
    %v51 = vrsqrt.pop %v49
    %v52 = vrsqrt.pop %v50
    %v53 = vld [vmem:[%s1] sm:$0x1]
    %v54 = vmul.f32 %v37, %v51
    %v55 = vmul.f32 %v38, %v52
    %v57 = vlaneseq
    %v58 = vshrl.u32 %v57, 7
    %v59 = vsub.s32 0, %v58
    %v60 = vrot.slane %v53, %v59
    %v62 = vmul.f32 %v60, %v54
    %v63 = vmul.f32 %v60, %v55
    %v64 = vld [vmem:[%s2] sm:$0x1]
    %v66 = vlaneseq
    %v67 = vshrl.u32 %v66, 7
    %v68 = vsub.s32 0, %v67
    %v69 = vrot.slane %v64, %v68
    %v71 = vadd.f32 %v62, %v69
    %v72 = vadd.f32 %v63, %v69
    %73 = vst [vmem:[#allocation5] sm:$0xff] %v71
    %74 = vst [vmem:[#allocation5 + $0x8] sm:$0xff] %v72
    // Predicated region
    $region18: #{tpu_custom_call.1} parent=1 // pred_check
      _
    $region19: #{tpu_custom_call.1} parent=1 // pred_check_branch
      %76 = sbr.rel (0) target = $region21
    $region20: #{tpu_custom_call.1} parent=1 // pred_region
      %s78 = ssub.s32 256, 256
      %79 = vsyncadd [#allocation4], %s78
      %s80 = sshll.u32 [#allocation5], 4
      %s81 = int_to_ptr.vmem [resolvable:$true] %s80
      %86 = dma.vmem_to_hbm [thread:$0]  %s81, 256, %s3, [#allocation4], 128, 128, 8
    $region21: #{tpu_custom_call.1} parent=1 // pred_fallthru
      _
    // Predicated region
    $region22: #{tpu_custom_call.1} parent=1 // pred_check
      _
    $region23: #{tpu_custom_call.1} parent=1 // pred_check_branch
      %88 = sbr.rel (0) target = $region25
    $region24: #{tpu_custom_call.1} parent=1 // pred_region
      %89 = dma.done [#allocation4], 256
    $region25: #{tpu_custom_call.1} parent=1 // pred_fallthru
      _
    %90 = vsyncpa [#allocation3], 1
    %91 = vsyncpa [#allocation4], 1

</llo_original>
